<compile_context>
chip_gen: v6e
topology: v6e:2x2x1
jax: 0.10.0
libtpu: 0.0.40
codegen_flags: <defaults>
</compile_context>

<pallas_src>
import functools

import jax
import jax.numpy as jnp
from jax.experimental import pallas as pl
from jax.experimental.pallas import tpu as pltpu

EPS = 1e-5          # nn.LayerNorm default
LANE = 128          # lane width / hidden-dim padding target


def _round_up(a, b):
    return pl.cdiv(a, b) * b


def _layer(h, w_ref, b_ref, inv_n):
    """fc -> ReLU -> LayerNorm (affine already folded into the *next* layer's params).

    Padded weight columns / bias lanes are zero, so padded activations are exactly 0
    after ReLU and drop out of the sums; inv_n = 1/real_width keeps LN stats exact.
    Padded lanes of the normalized output hit zero rows of the next weight.
    """
    z = jnp.dot(h.astype(w_ref.dtype), w_ref[...],
                preferred_element_type=jnp.float32)
    z = jnp.maximum(z + b_ref[...], 0.0)
    s1 = jnp.sum(z, axis=-1, keepdims=True)
    s2 = jnp.sum(z * z, axis=-1, keepdims=True)
    m = s1 * inv_n
    var = jnp.maximum(s2 * inv_n - m * m, 0.0)   # one-pass biased variance (f32)
    return (z - m) * jax.lax.rsqrt(var + EPS)


def mlp_kernel(x_ref,
               w1_ref, b1_ref,
               w2_ref, b2_ref,
               w3_ref, b3_ref,
               w4_ref, b4_ref,
               out_ref, *, inv_n):
    h = x_ref[...]                                   # bf16 [block_b, D]
    h = _layer(h, w1_ref, b1_ref, inv_n[0])
    h = _layer(h, w2_ref, b2_ref, inv_n[1])
    h = _layer(h, w3_ref, b3_ref, inv_n[2])
    out = jnp.dot(h.astype(w4_ref.dtype), w4_ref[...],
                  preferred_element_type=jnp.float32) + b4_ref[...]
    out_ref[...] = out.astype(out_ref.dtype)         # [block_b, NC] store (NC = full extent)


def prepare_params(p, *, use_bf16=True):
    """One-time prep: fold LN affine into next-layer weights, pad hidden dims to 128
    lanes, cast matmul weights to bf16. Returns a dict consumed by mlp_forward."""
    w_dtype = jnp.bfloat16 if use_bf16 else jnp.float32
    D, h1 = p["w1"].shape
    h2 = p["w2"].shape[1]
    h3 = p["w3"].shape[1]
    NC = p["w4"].shape[1]
    H1, H2, H3 = (_round_up(h, LANE) for h in (h1, h2, h3))

    # Fold LN affine (all in f32, exact up to rounding): y@W = n@(g.T*W) + (be@W).
    w1, b1 = p["w1"], p["b1"]
    w2 = p["w2"] * p["g1"].T
    b2 = p["b2"] + p["be1"] @ p["w2"]
    w3 = p["w3"] * p["g2"].T
    b3 = p["b3"] + p["be2"] @ p["w3"]
    w4 = p["w4"] * p["g3"].T
    b4 = p["b4"] + p["be3"] @ p["w4"]

    def padw(w, rows, cols):
        return jnp.pad(w, ((0, rows - w.shape[0]), (0, cols - w.shape[1]))).astype(w_dtype)

    def padb(b, cols):
        return jnp.pad(b, ((0, 0), (0, cols - b.shape[1]))).astype(jnp.float32)

    return dict(
        w1=padw(w1, D, H1), b1=padb(b1, H1),
        w2=padw(w2, H1, H2), b2=padb(b2, H2),
        w3=padw(w3, H2, H3), b3=padb(b3, H3),
        w4=padw(w4, H3, NC), b4=b4.astype(jnp.float32),
        dims=(D, h1, h2, h3, NC),
    )


def mlp_forward(x, prep, *, block_b=None):
    """x: [B, input_size] float32. prep: output of prepare_params."""
    B, D = x.shape
    D_w, h1, h2, h3, NC = prep["dims"]
    assert D == D_w, "input feature size mismatch"

    # Batch tiling: >= 2 grid steps (both TCs on v7x), large steps, 16-sublane aligned.
    if block_b is None:
        block_b = min(512, _round_up(pl.cdiv(B, 2), 16))
    block_b = max(16, _round_up(block_b, 16))
    B_pad = _round_up(B, block_b)

    xd = x.astype(prep["w1"].dtype)                  # stream x in matmul dtype (bf16)
    if B_pad != B:
        xd = jnp.pad(xd, ((0, B_pad - B), (0, 0)))

    flat = [prep[k] for k in ("w1", "b1", "w2", "b2", "w3", "b3", "w4", "b4")]

    def whole(a):
        nd = a.ndim
        return pl.BlockSpec(a.shape, lambda i, _nd=nd: (0,) * _nd)

    in_specs = [pl.BlockSpec((block_b, D), lambda i: (i, 0))]
    in_specs += [whole(a) for a in flat]

    H1, H2, H3 = prep["w1"].shape[1], prep["w2"].shape[1], prep["w3"].shape[1]
    flops = 2 * B_pad * (D * H1 + H1 * H2 + H2 * H3 + H3 * NC)
    bytes_accessed = (int(xd.size) * xd.dtype.itemsize
                      + B_pad * NC * 4
                      + sum(int(a.size) * a.dtype.itemsize for a in flat))
    cost = pl.CostEstimate(flops=int(flops), transcendentals=3 * int(B_pad),
                           bytes_accessed=int(bytes_accessed))

    kernel = functools.partial(mlp_kernel, inv_n=(1.0 / h1, 1.0 / h2, 1.0 / h3))

    out = pl.pallas_call(
        kernel,
        out_shape=jax.ShapeDtypeStruct((B_pad, NC), jnp.float32),
        grid_spec=pltpu.PrefetchScalarGridSpec(
            num_scalar_prefetch=0,
            grid=(B_pad // block_b,),
            in_specs=in_specs,
            out_specs=pl.BlockSpec((block_b, NC), lambda i: (i, 0)),
        ),
        compiler_params=pltpu.CompilerParams(
            dimension_semantics=("parallel",)),
        cost_estimate=cost,
    )(xd, *flat)

    return out[:B]


def init_params(key, input_size, h1, h2, h3, num_class):
    """Deterministic init. Linear weights stored pre-transposed as [in, out].
    gamma/beta are perturbed from the PyTorch defaults (1, 0) so the LN-affine
    folding path is actually exercised by the checks."""
    ks = jax.random.split(key, 14)

    def linear(kw, kb, fan_in, fan_out):
        bound = 1.0 / jnp.sqrt(fan_in)   # PyTorch default U(-1/sqrt(fan_in), +)
        w = jax.random.uniform(kw, (fan_in, fan_out), jnp.float32, -bound, bound)
        b = jax.random.uniform(kb, (1, fan_out), jnp.float32, -bound, bound)
        return w, b

    w1, b1 = linear(ks[0], ks[1], input_size, h1)
    w2, b2 = linear(ks[2], ks[3], h1, h2)
    w3, b3 = linear(ks[4], ks[5], h2, h3)
    w4, b4 = linear(ks[6], ks[7], h3, num_class)

    def affine(kg, kb, h):
        g = 1.0 + 0.2 * jax.random.normal(kg, (1, h), jnp.float32)
        b = 0.2 * jax.random.normal(kb, (1, h), jnp.float32)
        return g, b

    g1, be1 = affine(ks[8], ks[9], h1)
    g2, be2 = affine(ks[10], ks[11], h2)
    g3, be3 = affine(ks[12], ks[13], h3)

    return dict(w1=w1, b1=b1, g1=g1, be1=be1,
                w2=w2, b2=b2, g2=g2, be2=be2,
                w3=w3, b3=b3, g3=g3, be3=be3,
                w4=w4, b4=b4)


def mlp_reference(x, p):
    """Pure-JAX reference mirroring the PyTorch forward exactly (f32, unfolded)."""
    def ln(h, g, b):
        m = jnp.mean(h, axis=-1, keepdims=True)
        v = jnp.mean((h - m) ** 2, axis=-1, keepdims=True)
        return (h - m) / jnp.sqrt(v + EPS) * g + b

    h = jnp.maximum(x @ p["w1"] + p["b1"], 0.0)
    h = ln(h, p["g1"], p["be1"])
    h = jnp.maximum(h @ p["w2"] + p["b2"], 0.0)
    h = ln(h, p["g2"], p["be2"])
    h = jnp.maximum(h @ p["w3"] + p["b3"], 0.0)
    h = ln(h, p["g3"], p["be3"])
    return h @ p["w4"] + p["b4"]


if __name__ == "__main__":
    key = jax.random.PRNGKey(0)
    k_x, k_p = jax.random.split(key)

    batch = 64
    input_size, h1, h2, h3, num_class = 32, 64, 48, 40, 16

    x = jax.random.normal(k_x, (batch, input_size), jnp.float32)
    params = init_params(k_p, input_size, h1, h2, h3, num_class)
    ref = mlp_reference(x, params)

    # Production path: bf16 matmuls, f32 accumulation / bias / LN.
    prep = prepare_params(params, use_bf16=True)
    out = jax.block_until_ready(mlp_forward(x, prep))
    assert out.shape == (batch, num_class)
    assert jnp.allclose(out, ref, atol=2e-2, rtol=2e-2), "mismatch vs f32 reference"

    # Ragged / padded-batch path: must match the full-batch result row-for-row.
    out_small = jax.block_until_ready(mlp_forward(x[:50], prep))
    assert out_small.shape == (50, num_class)
    assert jnp.allclose(out_small, out[:50], atol=1e-5, rtol=1e-5), "ragged-batch mismatch"

    print("KERNEL_OK")
</pallas_src>

<mosaic_0001>
module attributes {stable_mosaic.version = 11 : i64} {
  func.func @mlp_kernel(%arg0: i32, %arg1: memref<32x32xbf16, #tpu.memory_space<vmem>>, %arg2: memref<32x128xbf16, #tpu.memory_space<vmem>>, %arg3: memref<1x128xf32, #tpu.memory_space<vmem>>, %arg4: memref<128x128xbf16, #tpu.memory_space<vmem>>, %arg5: memref<1x128xf32, #tpu.memory_space<vmem>>, %arg6: memref<128x128xbf16, #tpu.memory_space<vmem>>, %arg7: memref<1x128xf32, #tpu.memory_space<vmem>>, %arg8: memref<128x16xbf16, #tpu.memory_space<vmem>>, %arg9: memref<1x16xf32, #tpu.memory_space<vmem>>, %arg10: memref<32x16xf32, #tpu.memory_space<vmem>>) attributes {dimension_semantics = [#tpu.dimension_semantics<parallel>], iteration_bounds = array<i64: 2>, scalar_prefetch = 0 : i64, scratch_operands = 0 : i64, tpu.core_type = #tpu.core_type<tc>, window_params = [{transform_indices = @transform_0, window_bounds = array<i64: 32, 32>}, {pipeline_mode = #tpu.pipeline_mode<synchronous>, transform_indices = @transform_1, window_bounds = array<i64: 32, 128>}, {pipeline_mode = #tpu.pipeline_mode<synchronous>, transform_indices = @transform_2, window_bounds = array<i64: 1, 128>}, {pipeline_mode = #tpu.pipeline_mode<synchronous>, transform_indices = @transform_3, window_bounds = array<i64: 128, 128>}, {pipeline_mode = #tpu.pipeline_mode<synchronous>, transform_indices = @transform_4, window_bounds = array<i64: 1, 128>}, {pipeline_mode = #tpu.pipeline_mode<synchronous>, transform_indices = @transform_5, window_bounds = array<i64: 128, 128>}, {pipeline_mode = #tpu.pipeline_mode<synchronous>, transform_indices = @transform_6, window_bounds = array<i64: 1, 128>}, {pipeline_mode = #tpu.pipeline_mode<synchronous>, transform_indices = @transform_7, window_bounds = array<i64: 128, 16>}, {pipeline_mode = #tpu.pipeline_mode<synchronous>, transform_indices = @transform_8, window_bounds = array<i64: 1, 16>}, {transform_indices = @transform_9, window_bounds = array<i64: 32, 16>}]} {
    %c0 = arith.constant 0 : index
    %c0_0 = arith.constant 0 : index
    %0 = vector.load %arg1[%c0, %c0_0] : memref<32x32xbf16, #tpu.memory_space<vmem>>, vector<32x32xbf16>
    %c0_1 = arith.constant 0 : index
    %c0_2 = arith.constant 0 : index
    %1 = vector.load %arg2[%c0_1, %c0_2] : memref<32x128xbf16, #tpu.memory_space<vmem>>, vector<32x128xbf16>
    %cst = arith.constant dense<0.000000e+00> : vector<32x128xf32>
    %2 = tpu.matmul %0, %1, %cst {dimension_numbers = #tpu.dot_dimension_numbers<[1], [0], [0], [1], [0, 0, 1, 1], [], []>} : vector<32x32xbf16>, vector<32x128xbf16>, vector<32x128xf32> -> vector<32x128xf32>
    %c0_3 = arith.constant 0 : index
    %c0_4 = arith.constant 0 : index
    %3 = vector.load %arg3[%c0_3, %c0_4] : memref<1x128xf32, #tpu.memory_space<vmem>>, vector<1x128xf32>
    %4 = vector.broadcast %3 : vector<1x128xf32> to vector<32x128xf32>
    %5 = arith.addf %2, %4 : vector<32x128xf32>
    %cst_5 = arith.constant 0.000000e+00 : f32
    %6 = vector.broadcast %cst_5 : f32 to vector<32x128xf32>
    %7 = arith.maximumf %5, %6 : vector<32x128xf32>
    %cst_6 = arith.constant dense<0.000000e+00> : vector<32xf32>
    %8 = vector.multi_reduction <add>, %7, %cst_6 [1] : vector<32x128xf32> to vector<32xf32>
    %9 = vector.shape_cast %8 : vector<32xf32> to vector<32x1xf32>
    %10 = arith.mulf %7, %7 : vector<32x128xf32>
    %cst_7 = arith.constant dense<0.000000e+00> : vector<32xf32>
    %11 = vector.multi_reduction <add>, %10, %cst_7 [1] : vector<32x128xf32> to vector<32xf32>
    %12 = vector.shape_cast %11 : vector<32xf32> to vector<32x1xf32>
    %cst_8 = arith.constant 1.562500e-02 : f32
    %13 = vector.broadcast %cst_8 : f32 to vector<32x1xf32>
    %14 = arith.mulf %9, %13 : vector<32x1xf32>
    %cst_9 = arith.constant 1.562500e-02 : f32
    %15 = vector.broadcast %cst_9 : f32 to vector<32x1xf32>
    %16 = arith.mulf %12, %15 : vector<32x1xf32>
    %17 = arith.mulf %14, %14 : vector<32x1xf32>
    %18 = arith.subf %16, %17 : vector<32x1xf32>
    %cst_10 = arith.constant 0.000000e+00 : f32
    %19 = vector.broadcast %cst_10 : f32 to vector<32x1xf32>
    %20 = arith.maximumf %18, %19 : vector<32x1xf32>
    %21 = vector.broadcast %14 : vector<32x1xf32> to vector<32x128xf32>
    %22 = arith.subf %7, %21 : vector<32x128xf32>
    %cst_11 = arith.constant 9.99999974E-6 : f32
    %23 = vector.broadcast %cst_11 : f32 to vector<32x1xf32>
    %24 = arith.addf %20, %23 : vector<32x1xf32>
    %25 = math.rsqrt %24 : vector<32x1xf32>
    %26 = vector.broadcast %25 : vector<32x1xf32> to vector<32x128xf32>
    %27 = arith.mulf %22, %26 : vector<32x128xf32>
    %28 = arith.truncf %27 : vector<32x128xf32> to vector<32x128xbf16>
    %c0_12 = arith.constant 0 : index
    %c0_13 = arith.constant 0 : index
    %29 = vector.load %arg4[%c0_12, %c0_13] : memref<128x128xbf16, #tpu.memory_space<vmem>>, vector<128x128xbf16>
    %cst_14 = arith.constant dense<0.000000e+00> : vector<32x128xf32>
    %30 = tpu.matmul %28, %29, %cst_14 {dimension_numbers = #tpu.dot_dimension_numbers<[1], [0], [0], [1], [0, 0, 1, 1], [], []>} : vector<32x128xbf16>, vector<128x128xbf16>, vector<32x128xf32> -> vector<32x128xf32>
    %c0_15 = arith.constant 0 : index
    %c0_16 = arith.constant 0 : index
    %31 = vector.load %arg5[%c0_15, %c0_16] : memref<1x128xf32, #tpu.memory_space<vmem>>, vector<1x128xf32>
    %32 = vector.broadcast %31 : vector<1x128xf32> to vector<32x128xf32>
    %33 = arith.addf %30, %32 : vector<32x128xf32>
    %cst_17 = arith.constant 0.000000e+00 : f32
    %34 = vector.broadcast %cst_17 : f32 to vector<32x128xf32>
    %35 = arith.maximumf %33, %34 : vector<32x128xf32>
    %cst_18 = arith.constant dense<0.000000e+00> : vector<32xf32>
    %36 = vector.multi_reduction <add>, %35, %cst_18 [1] : vector<32x128xf32> to vector<32xf32>
    %37 = vector.shape_cast %36 : vector<32xf32> to vector<32x1xf32>
    %38 = arith.mulf %35, %35 : vector<32x128xf32>
    %cst_19 = arith.constant dense<0.000000e+00> : vector<32xf32>
    %39 = vector.multi_reduction <add>, %38, %cst_19 [1] : vector<32x128xf32> to vector<32xf32>
    %40 = vector.shape_cast %39 : vector<32xf32> to vector<32x1xf32>
    %cst_20 = arith.constant 0.020833334 : f32
    %41 = vector.broadcast %cst_20 : f32 to vector<32x1xf32>
    %42 = arith.mulf %37, %41 : vector<32x1xf32>
    %cst_21 = arith.constant 0.020833334 : f32
    %43 = vector.broadcast %cst_21 : f32 to vector<32x1xf32>
    %44 = arith.mulf %40, %43 : vector<32x1xf32>
    %45 = arith.mulf %42, %42 : vector<32x1xf32>
    %46 = arith.subf %44, %45 : vector<32x1xf32>
    %cst_22 = arith.constant 0.000000e+00 : f32
    %47 = vector.broadcast %cst_22 : f32 to vector<32x1xf32>
    %48 = arith.maximumf %46, %47 : vector<32x1xf32>
    %49 = vector.broadcast %42 : vector<32x1xf32> to vector<32x128xf32>
    %50 = arith.subf %35, %49 : vector<32x128xf32>
    %cst_23 = arith.constant 9.99999974E-6 : f32
    %51 = vector.broadcast %cst_23 : f32 to vector<32x1xf32>
    %52 = arith.addf %48, %51 : vector<32x1xf32>
    %53 = math.rsqrt %52 : vector<32x1xf32>
    %54 = vector.broadcast %53 : vector<32x1xf32> to vector<32x128xf32>
    %55 = arith.mulf %50, %54 : vector<32x128xf32>
    %56 = arith.truncf %55 : vector<32x128xf32> to vector<32x128xbf16>
    %c0_24 = arith.constant 0 : index
    %c0_25 = arith.constant 0 : index
    %57 = vector.load %arg6[%c0_24, %c0_25] : memref<128x128xbf16, #tpu.memory_space<vmem>>, vector<128x128xbf16>
    %cst_26 = arith.constant dense<0.000000e+00> : vector<32x128xf32>
    %58 = tpu.matmul %56, %57, %cst_26 {dimension_numbers = #tpu.dot_dimension_numbers<[1], [0], [0], [1], [0, 0, 1, 1], [], []>} : vector<32x128xbf16>, vector<128x128xbf16>, vector<32x128xf32> -> vector<32x128xf32>
    %c0_27 = arith.constant 0 : index
    %c0_28 = arith.constant 0 : index
    %59 = vector.load %arg7[%c0_27, %c0_28] : memref<1x128xf32, #tpu.memory_space<vmem>>, vector<1x128xf32>
    %60 = vector.broadcast %59 : vector<1x128xf32> to vector<32x128xf32>
    %61 = arith.addf %58, %60 : vector<32x128xf32>
    %cst_29 = arith.constant 0.000000e+00 : f32
    %62 = vector.broadcast %cst_29 : f32 to vector<32x128xf32>
    %63 = arith.maximumf %61, %62 : vector<32x128xf32>
    %cst_30 = arith.constant dense<0.000000e+00> : vector<32xf32>
    %64 = vector.multi_reduction <add>, %63, %cst_30 [1] : vector<32x128xf32> to vector<32xf32>
    %65 = vector.shape_cast %64 : vector<32xf32> to vector<32x1xf32>
    %66 = arith.mulf %63, %63 : vector<32x128xf32>
    %cst_31 = arith.constant dense<0.000000e+00> : vector<32xf32>
    %67 = vector.multi_reduction <add>, %66, %cst_31 [1] : vector<32x128xf32> to vector<32xf32>
    %68 = vector.shape_cast %67 : vector<32xf32> to vector<32x1xf32>
    %cst_32 = arith.constant 2.500000e-02 : f32
    %69 = vector.broadcast %cst_32 : f32 to vector<32x1xf32>
    %70 = arith.mulf %65, %69 : vector<32x1xf32>
    %cst_33 = arith.constant 2.500000e-02 : f32
    %71 = vector.broadcast %cst_33 : f32 to vector<32x1xf32>
    %72 = arith.mulf %68, %71 : vector<32x1xf32>
    %73 = arith.mulf %70, %70 : vector<32x1xf32>
    %74 = arith.subf %72, %73 : vector<32x1xf32>
    %cst_34 = arith.constant 0.000000e+00 : f32
    %75 = vector.broadcast %cst_34 : f32 to vector<32x1xf32>
    %76 = arith.maximumf %74, %75 : vector<32x1xf32>
    %77 = vector.broadcast %70 : vector<32x1xf32> to vector<32x128xf32>
    %78 = arith.subf %63, %77 : vector<32x128xf32>
    %cst_35 = arith.constant 9.99999974E-6 : f32
    %79 = vector.broadcast %cst_35 : f32 to vector<32x1xf32>
    %80 = arith.addf %76, %79 : vector<32x1xf32>
    %81 = math.rsqrt %80 : vector<32x1xf32>
    %82 = vector.broadcast %81 : vector<32x1xf32> to vector<32x128xf32>
    %83 = arith.mulf %78, %82 : vector<32x128xf32>
    %84 = arith.truncf %83 : vector<32x128xf32> to vector<32x128xbf16>
    %c0_36 = arith.constant 0 : index
    %c0_37 = arith.constant 0 : index
    %85 = vector.load %arg8[%c0_36, %c0_37] : memref<128x16xbf16, #tpu.memory_space<vmem>>, vector<128x16xbf16>
    %cst_38 = arith.constant dense<0.000000e+00> : vector<32x16xf32>
    %86 = tpu.matmul %84, %85, %cst_38 {dimension_numbers = #tpu.dot_dimension_numbers<[1], [0], [0], [1], [0, 0, 1, 1], [], []>} : vector<32x128xbf16>, vector<128x16xbf16>, vector<32x16xf32> -> vector<32x16xf32>
    %c0_39 = arith.constant 0 : index
    %c0_40 = arith.constant 0 : index
    %87 = vector.load %arg9[%c0_39, %c0_40] : memref<1x16xf32, #tpu.memory_space<vmem>>, vector<1x16xf32>
    %88 = vector.broadcast %87 : vector<1x16xf32> to vector<32x16xf32>
    %89 = arith.addf %86, %88 : vector<32x16xf32>
    %c0_41 = arith.constant 0 : index
    %c0_42 = arith.constant 0 : index
    %90 = vector.load %arg10[%c0_41, %c0_42] : memref<32x16xf32, #tpu.memory_space<vmem>>, vector<32x16xf32>
    tpu.vector_store %arg10[%c0_41, %c0_42], %89 {strides = array<i32>} : memref<32x16xf32, #tpu.memory_space<vmem>>, vector<32x16xf32>,
    return
  }
  func.func @transform_0(%arg0: i32) -> (i32, i32) {
    %c0_i32 = arith.constant 0 : i32
    %c0_i32_0 = arith.constant 0 : i32
    return %arg0, %c0_i32 : i32, i32
  }
  func.func @transform_1(%arg0: i32) -> (i32, i32) {
    %c0_i32 = arith.constant 0 : i32
    %c0_i32_0 = arith.constant 0 : i32
    %c0_i32_1 = arith.constant 0 : i32
    return %c0_i32, %c0_i32_0 : i32, i32
  }
  func.func @transform_2(%arg0: i32) -> (i32, i32) {
    %c0_i32 = arith.constant 0 : i32
    %c0_i32_0 = arith.constant 0 : i32
    %c0_i32_1 = arith.constant 0 : i32
    return %c0_i32, %c0_i32_0 : i32, i32
  }
  func.func @transform_3(%arg0: i32) -> (i32, i32) {
    %c0_i32 = arith.constant 0 : i32
    %c0_i32_0 = arith.constant 0 : i32
    %c0_i32_1 = arith.constant 0 : i32
    return %c0_i32, %c0_i32_0 : i32, i32
  }
  func.func @transform_4(%arg0: i32) -> (i32, i32) {
    %c0_i32 = arith.constant 0 : i32
    %c0_i32_0 = arith.constant 0 : i32
    %c0_i32_1 = arith.constant 0 : i32
    return %c0_i32, %c0_i32_0 : i32, i32
  }
  func.func @transform_5(%arg0: i32) -> (i32, i32) {
    %c0_i32 = arith.constant 0 : i32
    %c0_i32_0 = arith.constant 0 : i32
    %c0_i32_1 = arith.constant 0 : i32
    return %c0_i32, %c0_i32_0 : i32, i32
  }
  func.func @transform_6(%arg0: i32) -> (i32, i32) {
    %c0_i32 = arith.constant 0 : i32
    %c0_i32_0 = arith.constant 0 : i32
    %c0_i32_1 = arith.constant 0 : i32
    return %c0_i32, %c0_i32_0 : i32, i32
  }
  func.func @transform_7(%arg0: i32) -> (i32, i32) {
    %c0_i32 = arith.constant 0 : i32
    %c0_i32_0 = arith.constant 0 : i32
    %c0_i32_1 = arith.constant 0 : i32
    return %c0_i32, %c0_i32_0 : i32, i32
  }
  func.func @transform_8(%arg0: i32) -> (i32, i32) {
    %c0_i32 = arith.constant 0 : i32
    %c0_i32_0 = arith.constant 0 : i32
    %c0_i32_1 = arith.constant 0 : i32
    return %c0_i32, %c0_i32_0 : i32, i32
  }
  func.func @transform_9(%arg0: i32) -> (i32, i32) {
    %c0_i32 = arith.constant 0 : i32
    %c0_i32_0 = arith.constant 0 : i32
    return %arg0, %c0_i32 : i32, i32
  }
}

</mosaic_0001>

<llo_original>
// kernel: tpu_custom_call.1
$region0: #{tpu_custom_call.1}
  #allocation0 [shape = 'u32[]', space=smem, size = 0x4, offset = 0x4, fixed_abs, tag = 'smem constant byte address 0x4 - core index']
  #allocation1 [shape = 'u32[144,128]{1,0:T(1,128)}', space=vmem, size = 0x12000, scoped, tag = 'internal scratch']
  %s0 = inlined_call_operand.vmem [shape: bf16[64,32], index: 0, kind: input, shape index: {}]
  %s1 = inlined_call_operand.hbm [shape: bf16[32,128], index: 1, kind: input, shape index: {}]
  %s2 = inlined_call_operand.vmem [shape: f32[1,128], index: 2, kind: input, shape index: {}]
  %s3 = inlined_call_operand.vmem [shape: bf16[128,128], index: 3, kind: input, shape index: {}]
  %s4 = inlined_call_operand.hbm [shape: f32[1,128], index: 4, kind: input, shape index: {}]
  %s5 = inlined_call_operand.vmem [shape: bf16[128,128], index: 5, kind: input, shape index: {}]
  %s6 = inlined_call_operand.vmem [shape: f32[1,128], index: 6, kind: input, shape index: {}]
  %s7 = inlined_call_operand.vmem [shape: bf16[128,16], index: 7, kind: input, shape index: {}]
  %s8 = inlined_call_operand.vmem [shape: f32[1,16], index: 8, kind: input, shape index: {}]
  %s9 = inlined_call_operand.vmem [shape: f32[64,16], index: 9, kind: output, shape index: {}]
  %s10 = sld [smem:[#allocation0]]
  $region77: #{tpu_custom_call.1} parent=0
    _
  %s12 = ssub.s32 1, %s10
  %s13 = scalar_select 0, %s12, %s10
  $region1: #{tpu_custom_call.1} parent=0
    #allocation2 [shape = 'u8[8192]{0}', space=vmem, size = 0x2000, scoped, tag = 'input window, operand 1, single buffered']
    #allocation3 [shape = 's32[2]{0}', space=sflag, size = 0x8, scoped, tag = 'scoped memory for tpu_custom_call.1']
    #allocation4 [shape = 'u8[512]{0}', space=vmem, size = 0x400, scoped, tag = 'input window, operand 4, single buffered']
    #allocation5 [shape = 's32[1]{0}', space=sflag, size = 0x4, scoped, tag = 'scoped memory for tpu_custom_call.1']
    %14 = vsyncpa [#allocation3], 0
    %15 = vsyncpa [#allocation5], 0
    loop: start=0, step=1, limit=4
    $region2: #{tpu_custom_call.1} parent=1 // loop_pre_header
      _
    $region3: #{tpu_custom_call.1} parent=1 // loop_header
      %s17 = sphi 0, %s21
      %p18 = scmp.ge.s32.totalorder %s17, 4
      %s27 = sphi 0, %s29
      %s30 = sphi 0, %s27
      %s31 = sphi 0, %s30
      %s47 = sphi 0, %s31
      %s51 = sphi 0, %s51
      %s53 = sphi 0, %s51
      %s54 = sphi 0, %s53
      %s68 = sphi 0, %s54
      %s72 = sphi 0, %s72
      %s74 = sphi 0, %s72
      %s75 = sphi 0, %s74
      %s89 = sphi 0, %s75
      %s93 = sphi 0, %s93
      %s95 = sphi 0, %s93
      %s96 = sphi 0, %s95
      %s110 = sphi 0, %s96
      %s114 = sphi 0, %s114
      %s116 = sphi 0, %s114
      %s117 = sphi 0, %s116
      %s131 = sphi 0, %s117
      %s135 = sphi 0, %s135
      %s137 = sphi 0, %s135
      %s138 = sphi 0, %s137
      %s152 = sphi 0, %s138
      %s156 = sphi 0, %s156
      %s158 = sphi 0, %s156
      %s159 = sphi 0, %s158
      %s173 = sphi 0, %s159
      %s177 = sphi 0, %s177
      %s179 = sphi 0, %s177
      %s180 = sphi 0, %s179
      %s194 = sphi 0, %s180
      %s198 = sphi 0, %s198
      %s200 = sphi 0, %s198
      %s201 = sphi 0, %s200
      %s215 = sphi 0, %s201
      %s221 = sphi 0, %s223
      %s224 = sphi 0, %s221
      %s225 = sphi 0, %s224
      %s241 = sphi 0, %s225
    $region4: #{tpu_custom_call.1} parent=1 // loop_header_branch
      %20 = sbr.rel (%p18) target = $region8
    $region5: #{tpu_custom_call.1} parent=1 // loop_body
      %s22 = ssub.s32 %s17, 1
      %s23 = ssub.s32 %s17, 2
      %s24 = sadd.s32 %s17, 1
      %s25 = ssub.s32 %s17, %s24
      %p26 = scmp.eq.s32.totalorder %s25, 0
      %s28 = sadd.s32 %s27, 1
      %s29 = scalar_select %p26, %s27, %s28
      %p32 = pneg %p26
      %p33 = scmp.eq.s32.totalorder %s17, 1
      %p34 = por %p32, %p33
      %p35 = scmp.ne.s32.totalorder %s27, %s30
      %p36 = scmp.eq.s32.totalorder %s17, 0
      %p37 = por %p35, %p36
      %p38 = scmp.ne.s32.totalorder %s27, %s30
      %p39 = scmp.eq.s32.totalorder %s22, 1
      %p40 = por %p38, %p39
      %p41 = scmp.ne.s32.totalorder %s30, %s31
      %p42 = scmp.eq.s32.totalorder %s22, 0
      %p43 = por %p41, %p42
      %p44 = scmp.ne.s32.totalorder %s30, %s31
      %p45 = scmp.eq.s32.totalorder %s23, 1
      %p46 = por %p44, %p45
      %p48 = scmp.ne.s32.totalorder %s31, %s47
      %p49 = scmp.eq.s32.totalorder %s23, 0
      %p50 = por %p48, %p49
      %s52 = sadd.s32 %s51, 1
      %p55 = scmp.eq.s32.totalorder %s17, 1
      %p56 = scmp.ne.s32.totalorder %s51, %s53
      %p57 = scmp.eq.s32.totalorder %s17, 0
      %p58 = por %p56, %p57
      %p59 = scmp.ne.s32.totalorder %s51, %s53
      %p60 = scmp.eq.s32.totalorder %s22, 1
      %p61 = por %p59, %p60
      %p62 = scmp.ne.s32.totalorder %s53, %s54
      %p63 = scmp.eq.s32.totalorder %s22, 0
      %p64 = por %p62, %p63
      %p65 = scmp.ne.s32.totalorder %s53, %s54
      %p66 = scmp.eq.s32.totalorder %s23, 1
      %p67 = por %p65, %p66
      %p69 = scmp.ne.s32.totalorder %s54, %s68
      %p70 = scmp.eq.s32.totalorder %s23, 0
      %p71 = por %p69, %p70
      %s73 = sadd.s32 %s72, 1
      %p76 = scmp.eq.s32.totalorder %s17, 1
      %p77 = scmp.ne.s32.totalorder %s72, %s74
      %p78 = scmp.eq.s32.totalorder %s17, 0
      %p79 = por %p77, %p78
      %p80 = scmp.ne.s32.totalorder %s72, %s74
      %p81 = scmp.eq.s32.totalorder %s22, 1
      %p82 = por %p80, %p81
      %p83 = scmp.ne.s32.totalorder %s74, %s75
      %p84 = scmp.eq.s32.totalorder %s22, 0
      %p85 = por %p83, %p84
      %p86 = scmp.ne.s32.totalorder %s74, %s75
      %p87 = scmp.eq.s32.totalorder %s23, 1
      %p88 = por %p86, %p87
      %p90 = scmp.ne.s32.totalorder %s75, %s89
      %p91 = scmp.eq.s32.totalorder %s23, 0
      %p92 = por %p90, %p91
      %s94 = sadd.s32 %s93, 1
      %p97 = scmp.eq.s32.totalorder %s17, 1
      %p98 = scmp.ne.s32.totalorder %s93, %s95
      %p99 = scmp.eq.s32.totalorder %s17, 0
      %p100 = por %p98, %p99
      %p101 = scmp.ne.s32.totalorder %s93, %s95
      %p102 = scmp.eq.s32.totalorder %s22, 1
      %p103 = por %p101, %p102
      %p104 = scmp.ne.s32.totalorder %s95, %s96
      %p105 = scmp.eq.s32.totalorder %s22, 0
      %p106 = por %p104, %p105
      %p107 = scmp.ne.s32.totalorder %s95, %s96
      %p108 = scmp.eq.s32.totalorder %s23, 1
      %p109 = por %p107, %p108
      %p111 = scmp.ne.s32.totalorder %s96, %s110
      %p112 = scmp.eq.s32.totalorder %s23, 0
      %p113 = por %p111, %p112
      %s115 = sadd.s32 %s114, 1
      %p118 = scmp.eq.s32.totalorder %s17, 1
      %p119 = scmp.ne.s32.totalorder %s114, %s116
      %p120 = scmp.eq.s32.totalorder %s17, 0
      %p121 = por %p119, %p120
      %p122 = scmp.ne.s32.totalorder %s114, %s116
      %p123 = scmp.eq.s32.totalorder %s22, 1
      %p124 = por %p122, %p123
      %p125 = scmp.ne.s32.totalorder %s116, %s117
      %p126 = scmp.eq.s32.totalorder %s22, 0
      %p127 = por %p125, %p126
      %p128 = scmp.ne.s32.totalorder %s116, %s117
      %p129 = scmp.eq.s32.totalorder %s23, 1
      %p130 = por %p128, %p129
      %p132 = scmp.ne.s32.totalorder %s117, %s131
      %p133 = scmp.eq.s32.totalorder %s23, 0
      %p134 = por %p132, %p133
      %s136 = sadd.s32 %s135, 1
      %p139 = scmp.eq.s32.totalorder %s17, 1
      %p140 = scmp.ne.s32.totalorder %s135, %s137
      %p141 = scmp.eq.s32.totalorder %s17, 0
      %p142 = por %p140, %p141
      %p143 = scmp.ne.s32.totalorder %s135, %s137
      %p144 = scmp.eq.s32.totalorder %s22, 1
      %p145 = por %p143, %p144
      %p146 = scmp.ne.s32.totalorder %s137, %s138
      %p147 = scmp.eq.s32.totalorder %s22, 0
      %p148 = por %p146, %p147
      %p149 = scmp.ne.s32.totalorder %s137, %s138
      %p150 = scmp.eq.s32.totalorder %s23, 1
      %p151 = por %p149, %p150
      %p153 = scmp.ne.s32.totalorder %s138, %s152
      %p154 = scmp.eq.s32.totalorder %s23, 0
      %p155 = por %p153, %p154
      %s157 = sadd.s32 %s156, 1
      %p160 = scmp.eq.s32.totalorder %s17, 1
      %p161 = scmp.ne.s32.totalorder %s156, %s158
      %p162 = scmp.eq.s32.totalorder %s17, 0
      %p163 = por %p161, %p162
      %p164 = scmp.ne.s32.totalorder %s156, %s158
      %p165 = scmp.eq.s32.totalorder %s22, 1
      %p166 = por %p164, %p165
      %p167 = scmp.ne.s32.totalorder %s158, %s159
      %p168 = scmp.eq.s32.totalorder %s22, 0
      %p169 = por %p167, %p168
      %p170 = scmp.ne.s32.totalorder %s158, %s159
      %p171 = scmp.eq.s32.totalorder %s23, 1
      %p172 = por %p170, %p171
      %p174 = scmp.ne.s32.totalorder %s159, %s173
      %p175 = scmp.eq.s32.totalorder %s23, 0
      %p176 = por %p174, %p175
      %s178 = sadd.s32 %s177, 1
      %p181 = scmp.eq.s32.totalorder %s17, 1
      %p182 = scmp.ne.s32.totalorder %s177, %s179
      %p183 = scmp.eq.s32.totalorder %s17, 0
      %p184 = por %p182, %p183
      %p185 = scmp.ne.s32.totalorder %s177, %s179
      %p186 = scmp.eq.s32.totalorder %s22, 1
      %p187 = por %p185, %p186
      %p188 = scmp.ne.s32.totalorder %s179, %s180
      %p189 = scmp.eq.s32.totalorder %s22, 0
      %p190 = por %p188, %p189
      %p191 = scmp.ne.s32.totalorder %s179, %s180
      %p192 = scmp.eq.s32.totalorder %s23, 1
      %p193 = por %p191, %p192
      %p195 = scmp.ne.s32.totalorder %s180, %s194
      %p196 = scmp.eq.s32.totalorder %s23, 0
      %p197 = por %p195, %p196
      %s199 = sadd.s32 %s198, 1
      %p202 = scmp.eq.s32.totalorder %s17, 1
      %p203 = scmp.ne.s32.totalorder %s198, %s200
      %p204 = scmp.eq.s32.totalorder %s17, 0
      %p205 = por %p203, %p204
      %p206 = scmp.ne.s32.totalorder %s198, %s200
      %p207 = scmp.eq.s32.totalorder %s22, 1
      %p208 = por %p206, %p207
      %p209 = scmp.ne.s32.totalorder %s200, %s201
      %p210 = scmp.eq.s32.totalorder %s22, 0
      %p211 = por %p209, %p210
      %p212 = scmp.ne.s32.totalorder %s200, %s201
      %p213 = scmp.eq.s32.totalorder %s23, 1
      %p214 = por %p212, %p213
      %p216 = scmp.ne.s32.totalorder %s201, %s215
      %p217 = scmp.eq.s32.totalorder %s23, 0
      %p218 = por %p216, %p217
      %s219 = ssub.s32 %s17, %s24
      %p220 = scmp.eq.s32.totalorder %s219, 0
      %s222 = sadd.s32 %s221, 1
      %s223 = scalar_select %p220, %s221, %s222
      %p226 = pneg %p220
      %p227 = scmp.eq.s32.totalorder %s17, 1
      %p228 = por %p226, %p227
      %p229 = scmp.ne.s32.totalorder %s221, %s224
      %p230 = scmp.eq.s32.totalorder %s17, 0
      %p231 = por %p229, %p230
      %p232 = scmp.ne.s32.totalorder %s221, %s224
      %p233 = scmp.eq.s32.totalorder %s22, 1
      %p234 = por %p232, %p233
      %p235 = scmp.ne.s32.totalorder %s224, %s225
      %p236 = scmp.eq.s32.totalorder %s22, 0
      %p237 = por %p235, %p236
      %p238 = scmp.ne.s32.totalorder %s224, %s225
      %p239 = scmp.eq.s32.totalorder %s23, 1
      %p240 = por %p238, %p239
      %p242 = scmp.ne.s32.totalorder %s225, %s241
      %p243 = scmp.eq.s32.totalorder %s23, 0
      %p244 = por %p242, %p243
      %p245 = scmp.le.s32.totalorder 1, %s17
      %p246 = scmp.lt.s32.totalorder %s17, 3
      %p247 = pnand %p245, %p246
      %p248 = pneg %p247
      // Predicated region
      $region9: #{tpu_custom_call.1} parent=5 // pred_check
        _
      $region10: #{tpu_custom_call.1} parent=5 // pred_check_branch
        %250 = sbr.rel (%p247) target = $region12
      $region11: #{tpu_custom_call.1} parent=5 // pred_region
        %s251 = ssub.s32 %s17, 1
        // Predicated region
        $region13: #{tpu_custom_call.1} parent=11 // pred_check
          %p252 = pneg %p64
        $region14: #{tpu_custom_call.1} parent=11 // pred_check_branch
          %254 = sbr.rel (%p252) target = $region16
        $region15: #{tpu_custom_call.1} parent=11 // pred_region
          %s256 = ssub.s32 256, 256
          %257 = vsyncadd [#allocation3], %s256
          %s258 = sshll.u32 [#allocation2], 4
          %s259 = int_to_ptr.vmem [resolvable:$true] %s258
          %264 = dma.hbm_to_vmem [thread:$0]  %s1, 256, %s259, [#allocation3], 64, 64, 4
        $region16: #{tpu_custom_call.1} parent=11 // pred_fallthru
          _
        // Predicated region
        $region17: #{tpu_custom_call.1} parent=11 // pred_check
          %p265 = pneg %p85
        $region18: #{tpu_custom_call.1} parent=11 // pred_check_branch
          %267 = sbr.rel (%p265) target = $region20
        $region19: #{tpu_custom_call.1} parent=11 // pred_region
          _
        $region20: #{tpu_custom_call.1} parent=11 // pred_fallthru
          _
        // Predicated region
        $region21: #{tpu_custom_call.1} parent=11 // pred_check
          %p268 = pneg %p106
        $region22: #{tpu_custom_call.1} parent=11 // pred_check_branch
          %270 = sbr.rel (%p268) target = $region24
        $region23: #{tpu_custom_call.1} parent=11 // pred_region
          _
        $region24: #{tpu_custom_call.1} parent=11 // pred_fallthru
          _
        // Predicated region
        $region25: #{tpu_custom_call.1} parent=11 // pred_check
          %p271 = pneg %p127
        $region26: #{tpu_custom_call.1} parent=11 // pred_check_branch
          %273 = sbr.rel (%p271) target = $region28
        $region27: #{tpu_custom_call.1} parent=11 // pred_region
          %s275 = ssub.s32 16, 16
          %276 = vsyncadd [#allocation5], %s275
          %s278 = sshll.u32 [#allocation4], 4
          %s279 = int_to_ptr.vmem [resolvable:$true] %s278
          %281 = dma.hbm_to_vmem [thread:$0]  %s4, 16, %s279, [#allocation5]
        $region28: #{tpu_custom_call.1} parent=11 // pred_fallthru
          _
        // Predicated region
        $region29: #{tpu_custom_call.1} parent=11 // pred_check
          %p282 = pneg %p148
        $region30: #{tpu_custom_call.1} parent=11 // pred_check_branch
          %284 = sbr.rel (%p282) target = $region32
        $region31: #{tpu_custom_call.1} parent=11 // pred_region
          _
        $region32: #{tpu_custom_call.1} parent=11 // pred_fallthru
          _
        // Predicated region
        $region33: #{tpu_custom_call.1} parent=11 // pred_check
          %p285 = pneg %p169
        $region34: #{tpu_custom_call.1} parent=11 // pred_check_branch
          %287 = sbr.rel (%p285) target = $region36
        $region35: #{tpu_custom_call.1} parent=11 // pred_region
          _
        $region36: #{tpu_custom_call.1} parent=11 // pred_fallthru
          _
        // Predicated region
        $region37: #{tpu_custom_call.1} parent=11 // pred_check
          %p288 = pneg %p190
        $region38: #{tpu_custom_call.1} parent=11 // pred_check_branch
          %290 = sbr.rel (%p288) target = $region40
        $region39: #{tpu_custom_call.1} parent=11 // pred_region
          _
        $region40: #{tpu_custom_call.1} parent=11 // pred_fallthru
          _
        // Predicated region
        $region41: #{tpu_custom_call.1} parent=11 // pred_check
          %p291 = pneg %p211
        $region42: #{tpu_custom_call.1} parent=11 // pred_check_branch
          %293 = sbr.rel (%p291) target = $region44
        $region43: #{tpu_custom_call.1} parent=11 // pred_region
          _
        $region44: #{tpu_custom_call.1} parent=11 // pred_fallthru
          _
      $region12: #{tpu_custom_call.1} parent=5 // pred_fallthru
        _
      %p294 = scmp.lt.s32.totalorder %s17, 2
      // Predicated region
      $region45: #{tpu_custom_call.1} parent=5 // pred_check
        %p295 = pneg %p294
      $region46: #{tpu_custom_call.1} parent=5 // pred_check_branch
        %297 = sbr.rel (%p295) target = $region48
      $region47: #{tpu_custom_call.1} parent=5 // pred_region
        // Predicated region
        $region49: #{tpu_custom_call.1} parent=47 // pred_check
          %p298 = pneg %p37
        $region50: #{tpu_custom_call.1} parent=47 // pred_check_branch
          %300 = sbr.rel (%p298) target = $region52
        $region51: #{tpu_custom_call.1} parent=47 // pred_region
          %s301 = smul.u32 4, %s17
          %p302 = scmp.lt.s32.totalorder %s301, 7
          %s303 = scalar_select %p302, %s301, 7
          %s304 = smul.addr %s303, 4
          %s305 = scalar_lea.vmem %s0, %s304
          %s306 = smul.u32 4, %s17
        $region52: #{tpu_custom_call.1} parent=47 // pred_fallthru
          _
      $region48: #{tpu_custom_call.1} parent=5 // pred_fallthru
        _
      %p307 = scmp.le.s32.totalorder 1, %s17
      %p308 = scmp.lt.s32.totalorder %s17, 3
      %p309 = pnand %p307, %p308
      %p310 = pneg %p309
      // Predicated region
      $region53: #{tpu_custom_call.1} parent=5 // pred_check
        _
      $region54: #{tpu_custom_call.1} parent=5 // pred_check_branch
        %312 = sbr.rel (%p309) target = $region56
      $region55: #{tpu_custom_call.1} parent=5 // pred_region
        %s313 = ssub.s32 %s17, 1
        // Predicated region
        $region57: #{tpu_custom_call.1} parent=55 // pred_check
          %p314 = pneg %p64
        $region58: #{tpu_custom_call.1} parent=55 // pred_check_branch
          %316 = sbr.rel (%p314) target = $region60
        $region59: #{tpu_custom_call.1} parent=55 // pred_region
          %317 = dma.done [#allocation3], 256
        $region60: #{tpu_custom_call.1} parent=55 // pred_fallthru
          _
        // Predicated region
        $region61: #{tpu_custom_call.1} parent=55 // pred_check
          %p318 = pneg %p127
        $region62: #{tpu_custom_call.1} parent=55 // pred_check_branch
          %320 = sbr.rel (%p318) target = $region64
        $region63: #{tpu_custom_call.1} parent=55 // pred_region
          %321 = dma.done [#allocation5], 16
        $region64: #{tpu_custom_call.1} parent=55 // pred_fallthru
          _
        %s322 = smul.u32 4, %s22
        %p323 = scmp.lt.s32.totalorder %s322, 7
        %s324 = scalar_select %p323, %s322, 7
        %s325 = smul.addr %s324, 4
        %s326 = scalar_lea.vmem %s0, %s325
        %p327 = pneg %p43
        %p328 = pneg %p40
        %p329 = pneg %p64
        %p330 = pneg %p61
        %p331 = pneg %p85
        %p332 = pneg %p82
        %p333 = pneg %p106
        %p334 = pneg %p103
        %p335 = pneg %p127
        %p336 = pneg %p124
        %p337 = pneg %p148
        %p338 = pneg %p145
        %p339 = pneg %p169
        %p340 = pneg %p166
        %p341 = pneg %p190
        %p342 = pneg %p187
        %p343 = pneg %p211
        %p344 = pneg %p208
        %p345 = pneg %p237
        %p346 = pneg %p234
        %s347 = smul.u32 4, %s22
        %p348 = scmp.lt.s32.totalorder %s347, 7
        %s349 = scalar_select %p348, %s347, 7
        %s350 = smul.addr %s349, 8
        %s351 = scalar_lea.vmem %s9, %s350
        %s352 = smul.u32 4, %s22
        %p353 = scmp.lt.s32.totalorder %s352, 7
        %s354 = scalar_select %p353, %s352, 7
        %s355 = smul.addr %s354, 4
        %s356 = scalar_lea.vmem %s0, %s355
        %s357 = smul.u32 4, %s22
        %s358 = smul.u32 4, %s22
        %p359 = scmp.lt.s32.totalorder %s358, 7
        %s360 = scalar_select %p359, %s358, 7
        %s361 = smul.addr %s360, 8
        %s362 = scalar_lea.vmem %s9, %s361
        %s363 = smul.u32 4, %s22
        %v365 = vld [vmem:[%s356] sm:$0xf]
        %v366 = vld [vmem:[%s356 + $0x4] sm:$0xf]
        %v367 = vld [vmem:[%s356 + $0x8] sm:$0xf]
        %v368 = vld [vmem:[%s356 + $0xc] sm:$0xf]
        %v369 = vld [vmem:[#allocation2] sm:$0xf]
        %v370 = vld [vmem:[#allocation2 + $0x4] sm:$0xf]
        %v371 = vld [vmem:[#allocation2 + $0x8] sm:$0xf]
        %v372 = vld [vmem:[#allocation2 + $0xc] sm:$0xf]
        %v373 = vld [vmem:[%s2] sm:$0x1]
        %v375 = vlaneseq
        %v376 = vshrl.u32 %v375, 7
        %v377 = vsub.s32 0, %v376
        %v378 = vrot.slane %v373, %v377
        %v384 = vunpack.c.l.b16 %v365
        %v385 = vunpack.c.l.b16 %v366
        %v386 = vunpack.c.l.b16 %v367
        %v387 = vunpack.c.l.b16 %v368
        %v388 = vpack.c.b16 %v385, %v384
        %v389 = vpack.c.b16 %v387, %v386
        %v394 = vunpack.c.l.b16 %v369
        %v395 = vunpack.c.l.b16 %v370
        %v396 = vunpack.c.l.b16 %v371
        %v397 = vunpack.c.l.b16 %v372
        %v398 = vpack.c.b16 %v395, %v394
        %v399 = vpack.c.b16 %v397, %v396
        %vm402 = vcmask 261120
        %v404 = vsel %vm402, %v388, 0
        %v407 = vsel %vm402, %v389, 0
        %409 = vmatprep.subr.bf16.mxu0 0
        %410 = vmatpush1.bf16.msra.mxu0 0
        %411 = vmatprep.subr.bf16.mxu0 0
        %412 = vmatpush1.bf16.msra.mxu0 0
        %413 = vmatprep.subr.bf16.mxu0 0
        %414 = vmatpush1.bf16.msra.mxu0 0
        %415 = vmatprep.subr.bf16.mxu0 0
        %416 = vmatpush1.bf16.msra.mxu0 0
        %417 = vmatprep.subr.bf16.mxu0 0
        %418 = vmatpush1.bf16.msra.mxu0 0
        %419 = vmatprep.subr.bf16.mxu0 0
        %420 = vmatpush1.bf16.msra.mxu0 0
        %421 = vmatprep.subr.bf16.mxu0 0
        %422 = vmatpush1.bf16.msra.mxu0 %v399
        %423 = vmatprep.subr.bf16.mxu0 0
        %424 = vmatpush1.bf16.msra.mxu0 %v398
        %425 = vmatprep.subr.bf16.mxu0 0
        %426 = vmatpush2.bf16.msra.mxu0 0
        %427 = vmatprep.subr.bf16.mxu0 0
        %428 = vmatpush2.bf16.msra.mxu0 0
        %429 = vmatprep.subr.bf16.mxu0 0
        %430 = vmatpush2.bf16.msra.mxu0 0
        %431 = vmatprep.subr.bf16.mxu0 0
        %432 = vmatpush2.bf16.msra.mxu0 0
        %433 = vmatprep.subr.bf16.mxu0 0
        %434 = vmatpush2.bf16.msra.mxu0 0
        %435 = vmatprep.subr.bf16.mxu0 0
        %436 = vmatpush2.bf16.msra.mxu0 0
        %437 = vmatprep.subr.bf16.mxu0 0
        %438 = vmatpush2.bf16.msra.mxu0 0
        %439 = vmatprep.subr.bf16.mxu0 0
        %440 = vmatpush2.bf16.msra.mxu0 0
        %441 = vmatprep.mubr.bf16.mxu0 0
        %442 = vmatmul.mubr.bf16.gmra.mxu0 %v404
        %v443 = vpop.f32.mrf.mxu0
        %v444 = vadd.f32 %v378, %v443
        %v445 = vpop.f32.mrf.mxu0
        %v446 = vpop.f32.mrf.mxu0
        %v447 = vadd.f32 %v378, %v446
        %v448 = vpop.f32.mrf.mxu0
        %449 = vmatprep.mubr.bf16.mxu0 0
        %450 = vmatmul.mubr.bf16.gmra.mxu0 %v407
        %v451 = vpop.f32.mrf.mxu0
        %v452 = vadd.f32 %v378, %v451
        %v453 = vpop.f32.mrf.mxu0
        %v454 = vpop.f32.mrf.mxu0
        %v455 = vadd.f32 %v378, %v454
        %v456 = vpop.f32.mrf.mxu0
        %457 = vdwg.mxu0
        %v458 = vmax.f32 %v444, 0.0
        %v459 = vmax.f32 %v447, 0.0
        %v460 = vmax.f32 %v452, 0.0
        %v461 = vmax.f32 %v455, 0.0
        %462 = vadd.xlane.f32.xlu0 %v458
        %v463 = vpop.xlane.xlu0 %462
        %464 = vadd.xlane.f32.xlu0 %v459
        %v465 = vpop.xlane.xlu0 %464
        %466 = vadd.xlane.f32.xlu0 %v460
        %v467 = vpop.xlane.xlu0 %466
        %468 = vadd.xlane.f32.xlu0 %v461
        %v469 = vpop.xlane.xlu0 %468
        %v470 = vmul.f32 %v458, %v458
        %v471 = vmul.f32 %v459, %v459
        %v472 = vmul.f32 %v460, %v460
        %v473 = vmul.f32 %v461, %v461
        %474 = vadd.xlane.f32.xlu0 %v470
        %v475 = vpop.xlane.xlu0 %474
        %476 = vadd.xlane.f32.xlu0 %v471
        %v477 = vpop.xlane.xlu0 %476
        %478 = vadd.xlane.f32.xlu0 %v472
        %v479 = vpop.xlane.xlu0 %478
        %480 = vadd.xlane.f32.xlu0 %v473
        %v481 = vpop.xlane.xlu0 %480
        %v482 = vmul.f32 %v463, 0.015625
        %v483 = vmul.f32 %v465, 0.015625
        %v484 = vmul.f32 %v467, 0.015625
        %v485 = vmul.f32 %v469, 0.015625
        %v486 = vmul.f32 %v475, 0.015625
        %v487 = vmul.f32 %v477, 0.015625
        %v488 = vmul.f32 %v479, 0.015625
        %v489 = vmul.f32 %v481, 0.015625
        %v490 = vmul.f32 %v482, %v482
        %v491 = vmul.f32 %v483, %v483
        %v492 = vmul.f32 %v484, %v484
        %v493 = vmul.f32 %v485, %v485
        %v494 = vsub.f32 %v486, %v490
        %v495 = vsub.f32 %v487, %v491
        %v496 = vsub.f32 %v488, %v492
        %v497 = vsub.f32 %v489, %v493
        %v498 = vmax.f32 %v494, 0.0
        %v499 = vmax.f32 %v495, 0.0
        %v500 = vmax.f32 %v496, 0.0
        %v501 = vmax.f32 %v497, 0.0
        %v502 = vsub.f32 %v458, %v482
        %v503 = vsub.f32 %v459, %v483
        %v504 = vsub.f32 %v460, %v484
        %v505 = vsub.f32 %v461, %v485
        %v506 = vadd.f32 %v498, 1e-05
        %v507 = vadd.f32 %v499, 1e-05
        %v508 = vadd.f32 %v500, 1e-05
        %v509 = vadd.f32 %v501, 1e-05
        %v510 = vrsqrt.pop %v506
        %v511 = vrsqrt.pop %v507
        %v512 = vrsqrt.pop %v508
        %v513 = vrsqrt.pop %v509
        %v514 = vmul.f32 %v502, %v510
        %v515 = vmul.f32 %v503, %v511
        %v516 = vmul.f32 %v504, %v512
        %v517 = vmul.f32 %v505, %v513
        %v518 = vpack.c.bf16 %v515, %v514
        %v519 = vpack.c.bf16 %v517, %v516
        %v520 = vld [vmem:[%s3] sm:$0xf]
        %v521 = vld [vmem:[%s3 + $0x4] sm:$0xf]
        %v522 = vld [vmem:[%s3 + $0x8] sm:$0xf]
        %v523 = vld [vmem:[%s3 + $0xc] sm:$0xf]
        %v524 = vld [vmem:[%s3 + $0x10] sm:$0xf]
        %v525 = vld [vmem:[%s3 + $0x14] sm:$0xf]
        %v526 = vld [vmem:[%s3 + $0x18] sm:$0xf]
        %v527 = vld [vmem:[%s3 + $0x1c] sm:$0xf]
        %v528 = vld [vmem:[%s3 + $0x20] sm:$0xf]
        %v529 = vld [vmem:[%s3 + $0x24] sm:$0xf]
        %v530 = vld [vmem:[%s3 + $0x28] sm:$0xf]
        %v531 = vld [vmem:[%s3 + $0x2c] sm:$0xf]
        %v532 = vld [vmem:[%s3 + $0x30] sm:$0xf]
        %v533 = vld [vmem:[%s3 + $0x34] sm:$0xf]
        %v534 = vld [vmem:[%s3 + $0x38] sm:$0xf]
        %v535 = vld [vmem:[%s3 + $0x3c] sm:$0xf]
        %v536 = vld [vmem:[#allocation4] sm:$0x1]
        %v538 = vlaneseq
        %v539 = vshrl.u32 %v538, 7
        %v540 = vsub.s32 0, %v539
        %v541 = vrot.slane %v536, %v540
        %v559 = vunpack.c.l.b16 %v520
        %v560 = vunpack.c.l.b16 %v521
        %v561 = vunpack.c.l.b16 %v522
        %v562 = vunpack.c.l.b16 %v523
        %v563 = vunpack.c.l.b16 %v524
        %v564 = vunpack.c.l.b16 %v525
        %v565 = vunpack.c.l.b16 %v526
        %v566 = vunpack.c.l.b16 %v527
        %v567 = vunpack.c.l.b16 %v528
        %v568 = vunpack.c.l.b16 %v529
        %v569 = vunpack.c.l.b16 %v530
        %v570 = vunpack.c.l.b16 %v531
        %v571 = vunpack.c.l.b16 %v532
        %v572 = vunpack.c.l.b16 %v533
        %v573 = vunpack.c.l.b16 %v534
        %v574 = vunpack.c.l.b16 %v535
        %v575 = vpack.c.b16 %v560, %v559
        %v576 = vpack.c.b16 %v562, %v561
        %v577 = vpack.c.b16 %v564, %v563
        %v578 = vpack.c.b16 %v566, %v565
        %v579 = vpack.c.b16 %v568, %v567
        %v580 = vpack.c.b16 %v570, %v569
        %v581 = vpack.c.b16 %v572, %v571
        %v582 = vpack.c.b16 %v574, %v573
        %591 = vmatprep.subr.bf16.mxu0 0
        %592 = vmatpush1.bf16.msra.mxu0 %v582
        %593 = vmatprep.subr.bf16.mxu0 0
        %594 = vmatpush1.bf16.msra.mxu0 %v581
        %595 = vmatprep.subr.bf16.mxu0 0
        %596 = vmatpush1.bf16.msra.mxu0 %v580
        %597 = vmatprep.subr.bf16.mxu0 0
        %598 = vmatpush1.bf16.msra.mxu0 %v579
        %599 = vmatprep.subr.bf16.mxu0 0
        %600 = vmatpush1.bf16.msra.mxu0 %v578
        %601 = vmatprep.subr.bf16.mxu0 0
        %602 = vmatpush1.bf16.msra.mxu0 %v577
        %603 = vmatprep.subr.bf16.mxu0 0
        %604 = vmatpush1.bf16.msra.mxu0 %v576
        %605 = vmatprep.subr.bf16.mxu0 0
        %606 = vmatpush1.bf16.msra.mxu0 %v575
        %607 = vmatprep.subr.bf16.mxu0 0
        %608 = vmatpush2.bf16.msra.mxu0 0
        %609 = vmatprep.subr.bf16.mxu0 0
        %610 = vmatpush2.bf16.msra.mxu0 0
        %611 = vmatprep.subr.bf16.mxu0 0
        %612 = vmatpush2.bf16.msra.mxu0 0
        %613 = vmatprep.subr.bf16.mxu0 0
        %614 = vmatpush2.bf16.msra.mxu0 0
        %615 = vmatprep.subr.bf16.mxu0 0
        %616 = vmatpush2.bf16.msra.mxu0 0
        %617 = vmatprep.subr.bf16.mxu0 0
        %618 = vmatpush2.bf16.msra.mxu0 0
        %619 = vmatprep.subr.bf16.mxu0 0
        %620 = vmatpush2.bf16.msra.mxu0 0
        %621 = vmatprep.subr.bf16.mxu0 0
        %622 = vmatpush2.bf16.msra.mxu0 0
        %623 = vmatprep.mubr.bf16.mxu0 0
        %624 = vmatmul.mubr.bf16.gmra.mxu0 %v518
        %v625 = vpop.f32.mrf.mxu0
        %v626 = vadd.f32 %v541, %v625
        %v627 = vpop.f32.mrf.mxu0
        %v628 = vpop.f32.mrf.mxu0
        %v629 = vadd.f32 %v541, %v628
        %v630 = vpop.f32.mrf.mxu0
        %631 = vmatprep.mubr.bf16.mxu0 0
        %632 = vmatmul.mubr.bf16.gmra.mxu0 %v519
        %v633 = vpop.f32.mrf.mxu0
        %v634 = vadd.f32 %v541, %v633
        %v635 = vpop.f32.mrf.mxu0
        %v636 = vpop.f32.mrf.mxu0
        %v637 = vadd.f32 %v541, %v636
        %v638 = vpop.f32.mrf.mxu0
        %639 = vdwg.mxu0
        %v640 = vmax.f32 %v626, 0.0
        %v641 = vmax.f32 %v629, 0.0
        %v642 = vmax.f32 %v634, 0.0
        %v643 = vmax.f32 %v637, 0.0
        %644 = vadd.xlane.f32.xlu0 %v640
        %v645 = vpop.xlane.xlu0 %644
        %646 = vadd.xlane.f32.xlu0 %v641
        %v647 = vpop.xlane.xlu0 %646
        %648 = vadd.xlane.f32.xlu0 %v642
        %v649 = vpop.xlane.xlu0 %648
        %650 = vadd.xlane.f32.xlu0 %v643
        %v651 = vpop.xlane.xlu0 %650
        %v652 = vmul.f32 %v640, %v640
        %v653 = vmul.f32 %v641, %v641
        %v654 = vmul.f32 %v642, %v642
        %v655 = vmul.f32 %v643, %v643
        %656 = vadd.xlane.f32.xlu0 %v652
        %v657 = vpop.xlane.xlu0 %656
        %658 = vadd.xlane.f32.xlu0 %v653
        %v659 = vpop.xlane.xlu0 %658
        %660 = vadd.xlane.f32.xlu0 %v654
        %v661 = vpop.xlane.xlu0 %660
        %662 = vadd.xlane.f32.xlu0 %v655
        %v663 = vpop.xlane.xlu0 %662
        %v664 = vmul.f32 %v645, 0.020833334
        %v665 = vmul.f32 %v647, 0.020833334
        %v666 = vmul.f32 %v649, 0.020833334
        %v667 = vmul.f32 %v651, 0.020833334
        %v668 = vmul.f32 %v657, 0.020833334
        %v669 = vmul.f32 %v659, 0.020833334
        %v670 = vmul.f32 %v661, 0.020833334
        %v671 = vmul.f32 %v663, 0.020833334
        %v672 = vmul.f32 %v664, %v664
        %v673 = vmul.f32 %v665, %v665
        %v674 = vmul.f32 %v666, %v666
        %v675 = vmul.f32 %v667, %v667
        %v676 = vsub.f32 %v668, %v672
        %v677 = vsub.f32 %v669, %v673
        %v678 = vsub.f32 %v670, %v674
        %v679 = vsub.f32 %v671, %v675
        %v680 = vmax.f32 %v676, 0.0
        %v681 = vmax.f32 %v677, 0.0
        %v682 = vmax.f32 %v678, 0.0
        %v683 = vmax.f32 %v679, 0.0
        %v684 = vsub.f32 %v640, %v664
        %v685 = vsub.f32 %v641, %v665
        %v686 = vsub.f32 %v642, %v666
        %v687 = vsub.f32 %v643, %v667
        %v688 = vadd.f32 %v680, 1e-05
        %v689 = vadd.f32 %v681, 1e-05
        %v690 = vadd.f32 %v682, 1e-05
        %v691 = vadd.f32 %v683, 1e-05
        %v692 = vrsqrt.pop %v688
        %v693 = vrsqrt.pop %v689
        %v694 = vrsqrt.pop %v690
        %v695 = vrsqrt.pop %v691
        %v696 = vmul.f32 %v684, %v692
        %v697 = vmul.f32 %v685, %v693
        %v698 = vmul.f32 %v686, %v694
        %v699 = vmul.f32 %v687, %v695
        %v700 = vpack.c.bf16 %v697, %v696
        %v701 = vpack.c.bf16 %v699, %v698
        %v702 = vld [vmem:[%s5] sm:$0xf]
        %v703 = vld [vmem:[%s5 + $0x4] sm:$0xf]
        %v704 = vld [vmem:[%s5 + $0x8] sm:$0xf]
        %v705 = vld [vmem:[%s5 + $0xc] sm:$0xf]
        %v706 = vld [vmem:[%s5 + $0x10] sm:$0xf]
        %v707 = vld [vmem:[%s5 + $0x14] sm:$0xf]
        %v708 = vld [vmem:[%s5 + $0x18] sm:$0xf]
        %v709 = vld [vmem:[%s5 + $0x1c] sm:$0xf]
        %v710 = vld [vmem:[%s5 + $0x20] sm:$0xf]
        %v711 = vld [vmem:[%s5 + $0x24] sm:$0xf]
        %v712 = vld [vmem:[%s5 + $0x28] sm:$0xf]
        %v713 = vld [vmem:[%s5 + $0x2c] sm:$0xf]
        %v714 = vld [vmem:[%s5 + $0x30] sm:$0xf]
        %v715 = vld [vmem:[%s5 + $0x34] sm:$0xf]
        %v716 = vld [vmem:[%s5 + $0x38] sm:$0xf]
        %v717 = vld [vmem:[%s5 + $0x3c] sm:$0xf]
        %v718 = vld [vmem:[%s6] sm:$0x1]
        %v720 = vlaneseq
        %v721 = vshrl.u32 %v720, 7
        %v722 = vsub.s32 0, %v721
        %v723 = vrot.slane %v718, %v722
        %v741 = vunpack.c.l.b16 %v702
        %v742 = vunpack.c.l.b16 %v703
        %v743 = vunpack.c.l.b16 %v704
        %v744 = vunpack.c.l.b16 %v705
        %v745 = vunpack.c.l.b16 %v706
        %v746 = vunpack.c.l.b16 %v707
        %v747 = vunpack.c.l.b16 %v708
        %v748 = vunpack.c.l.b16 %v709
        %v749 = vunpack.c.l.b16 %v710
        %v750 = vunpack.c.l.b16 %v711
        %v751 = vunpack.c.l.b16 %v712
        %v752 = vunpack.c.l.b16 %v713
        %v753 = vunpack.c.l.b16 %v714
        %v754 = vunpack.c.l.b16 %v715
        %v755 = vunpack.c.l.b16 %v716
        %v756 = vunpack.c.l.b16 %v717
        %v757 = vpack.c.b16 %v742, %v741
        %v758 = vpack.c.b16 %v744, %v743
        %v759 = vpack.c.b16 %v746, %v745
        %v760 = vpack.c.b16 %v748, %v747
        %v761 = vpack.c.b16 %v750, %v749
        %v762 = vpack.c.b16 %v752, %v751
        %v763 = vpack.c.b16 %v754, %v753
        %v764 = vpack.c.b16 %v756, %v755
        %773 = vmatprep.subr.bf16.mxu0 0
        %774 = vmatpush1.bf16.msra.mxu0 %v764
        %775 = vmatprep.subr.bf16.mxu0 0
        %776 = vmatpush1.bf16.msra.mxu0 %v763
        %777 = vmatprep.subr.bf16.mxu0 0
        %778 = vmatpush1.bf16.msra.mxu0 %v762
        %779 = vmatprep.subr.bf16.mxu0 0
        %780 = vmatpush1.bf16.msra.mxu0 %v761
        %781 = vmatprep.subr.bf16.mxu0 0
        %782 = vmatpush1.bf16.msra.mxu0 %v760
        %783 = vmatprep.subr.bf16.mxu0 0
        %784 = vmatpush1.bf16.msra.mxu0 %v759
        %785 = vmatprep.subr.bf16.mxu0 0
        %786 = vmatpush1.bf16.msra.mxu0 %v758
        %787 = vmatprep.subr.bf16.mxu0 0
        %788 = vmatpush1.bf16.msra.mxu0 %v757
        %789 = vmatprep.subr.bf16.mxu0 0
        %790 = vmatpush2.bf16.msra.mxu0 0
        %791 = vmatprep.subr.bf16.mxu0 0
        %792 = vmatpush2.bf16.msra.mxu0 0
        %793 = vmatprep.subr.bf16.mxu0 0
        %794 = vmatpush2.bf16.msra.mxu0 0
        %795 = vmatprep.subr.bf16.mxu0 0
        %796 = vmatpush2.bf16.msra.mxu0 0
        %797 = vmatprep.subr.bf16.mxu0 0
        %798 = vmatpush2.bf16.msra.mxu0 0
        %799 = vmatprep.subr.bf16.mxu0 0
        %800 = vmatpush2.bf16.msra.mxu0 0
        %801 = vmatprep.subr.bf16.mxu0 0
        %802 = vmatpush2.bf16.msra.mxu0 0
        %803 = vmatprep.subr.bf16.mxu0 0
        %804 = vmatpush2.bf16.msra.mxu0 0
        %805 = vmatprep.mubr.bf16.mxu0 0
        %806 = vmatmul.mubr.bf16.gmra.mxu0 %v700
        %v807 = vpop.f32.mrf.mxu0
        %v808 = vadd.f32 %v723, %v807
        %v809 = vpop.f32.mrf.mxu0
        %v810 = vpop.f32.mrf.mxu0
        %v811 = vadd.f32 %v723, %v810
        %v812 = vpop.f32.mrf.mxu0
        %813 = vmatprep.mubr.bf16.mxu0 0
        %814 = vmatmul.mubr.bf16.gmra.mxu0 %v701
        %v815 = vpop.f32.mrf.mxu0
        %v816 = vadd.f32 %v723, %v815
        %v817 = vpop.f32.mrf.mxu0
        %v818 = vpop.f32.mrf.mxu0
        %v819 = vadd.f32 %v723, %v818
        %v820 = vpop.f32.mrf.mxu0
        %821 = vdwg.mxu0
        %v822 = vmax.f32 %v808, 0.0
        %v823 = vmax.f32 %v811, 0.0
        %v824 = vmax.f32 %v816, 0.0
        %v825 = vmax.f32 %v819, 0.0
        %826 = vadd.xlane.f32.xlu0 %v822
        %v827 = vpop.xlane.xlu0 %826
        %828 = vadd.xlane.f32.xlu0 %v823
        %v829 = vpop.xlane.xlu0 %828
        %830 = vadd.xlane.f32.xlu0 %v824
        %v831 = vpop.xlane.xlu0 %830
        %832 = vadd.xlane.f32.xlu0 %v825
        %v833 = vpop.xlane.xlu0 %832
        %v834 = vmul.f32 %v822, %v822
        %v835 = vmul.f32 %v823, %v823
        %v836 = vmul.f32 %v824, %v824
        %v837 = vmul.f32 %v825, %v825
        %838 = vadd.xlane.f32.xlu0 %v834
        %v839 = vpop.xlane.xlu0 %838
        %840 = vadd.xlane.f32.xlu0 %v835
        %v841 = vpop.xlane.xlu0 %840
        %842 = vadd.xlane.f32.xlu0 %v836
        %v843 = vpop.xlane.xlu0 %842
        %844 = vadd.xlane.f32.xlu0 %v837
        %v845 = vpop.xlane.xlu0 %844
        %v846 = vmul.f32 %v827, 0.025
        %v847 = vmul.f32 %v829, 0.025
        %v848 = vmul.f32 %v831, 0.025
        %v849 = vmul.f32 %v833, 0.025
        %v850 = vmul.f32 %v839, 0.025
        %v851 = vmul.f32 %v841, 0.025
        %v852 = vmul.f32 %v843, 0.025
        %v853 = vmul.f32 %v845, 0.025
        %v854 = vmul.f32 %v846, %v846
        %v855 = vmul.f32 %v847, %v847
        %v856 = vmul.f32 %v848, %v848
        %v857 = vmul.f32 %v849, %v849
        %v858 = vsub.f32 %v850, %v854
        %v859 = vsub.f32 %v851, %v855
        %v860 = vsub.f32 %v852, %v856
        %v861 = vsub.f32 %v853, %v857
        %v862 = vmax.f32 %v858, 0.0
        %v863 = vmax.f32 %v859, 0.0
        %v864 = vmax.f32 %v860, 0.0
        %v865 = vmax.f32 %v861, 0.0
        %v866 = vsub.f32 %v822, %v846
        %v867 = vsub.f32 %v823, %v847
        %v868 = vsub.f32 %v824, %v848
        %v869 = vsub.f32 %v825, %v849
        %v870 = vadd.f32 %v862, 1e-05
        %v871 = vadd.f32 %v863, 1e-05
        %v872 = vadd.f32 %v864, 1e-05
        %v873 = vadd.f32 %v865, 1e-05
        %v874 = vrsqrt.pop %v870
        %v875 = vrsqrt.pop %v871
        %v876 = vrsqrt.pop %v872
        %v877 = vrsqrt.pop %v873
        %v878 = vmul.f32 %v866, %v874
        %v879 = vmul.f32 %v867, %v875
        %v880 = vmul.f32 %v868, %v876
        %v881 = vmul.f32 %v869, %v877
        %v882 = vpack.c.bf16 %v879, %v878
        %v883 = vpack.c.bf16 %v881, %v880
        %v884 = vld [vmem:[%s7] sm:$0xf]
        %v885 = vld [vmem:[%s7 + $0x4] sm:$0xf]
        %v886 = vld [vmem:[%s7 + $0x8] sm:$0xf]
        %v887 = vld [vmem:[%s7 + $0xc] sm:$0xf]
        %v888 = vld [vmem:[%s7 + $0x10] sm:$0xf]
        %v889 = vld [vmem:[%s7 + $0x14] sm:$0xf]
        %v890 = vld [vmem:[%s7 + $0x18] sm:$0xf]
        %v891 = vld [vmem:[%s7 + $0x1c] sm:$0xf]
        %v892 = vld [vmem:[%s7 + $0x20] sm:$0xf]
        %v893 = vld [vmem:[%s7 + $0x24] sm:$0xf]
        %v894 = vld [vmem:[%s7 + $0x28] sm:$0xf]
        %v895 = vld [vmem:[%s7 + $0x2c] sm:$0xf]
        %v896 = vld [vmem:[%s7 + $0x30] sm:$0xf]
        %v897 = vld [vmem:[%s7 + $0x34] sm:$0xf]
        %v898 = vld [vmem:[%s7 + $0x38] sm:$0xf]
        %v899 = vld [vmem:[%s7 + $0x3c] sm:$0xf]
        %v900 = vld [vmem:[%s8] sm:$0x1]
        %v902 = vlaneseq
        %v903 = vshrl.u32 %v902, 7
        %v904 = vsub.s32 0, %v903
        %v905 = vrot.slane %v900, %v904
        %v923 = vunpack.c.l.b16 %v884
        %v924 = vunpack.c.l.b16 %v885
        %v925 = vunpack.c.l.b16 %v886
        %v926 = vunpack.c.l.b16 %v887
        %v927 = vunpack.c.l.b16 %v888
        %v928 = vunpack.c.l.b16 %v889
        %v929 = vunpack.c.l.b16 %v890
        %v930 = vunpack.c.l.b16 %v891
        %v931 = vunpack.c.l.b16 %v892
        %v932 = vunpack.c.l.b16 %v893
        %v933 = vunpack.c.l.b16 %v894
        %v934 = vunpack.c.l.b16 %v895
        %v935 = vunpack.c.l.b16 %v896
        %v936 = vunpack.c.l.b16 %v897
        %v937 = vunpack.c.l.b16 %v898
        %v938 = vunpack.c.l.b16 %v899
        %v939 = vpack.c.b16 %v924, %v923
        %v940 = vpack.c.b16 %v926, %v925
        %v941 = vpack.c.b16 %v928, %v927
        %v942 = vpack.c.b16 %v930, %v929
        %v943 = vpack.c.b16 %v932, %v931
        %v944 = vpack.c.b16 %v934, %v933
        %v945 = vpack.c.b16 %v936, %v935
        %v946 = vpack.c.b16 %v938, %v937
        %955 = vmatprep.subr.bf16.mxu0 0
        %956 = vmatpush1.bf16.msra.mxu0 %v946
        %957 = vmatprep.subr.bf16.mxu0 0
        %958 = vmatpush1.bf16.msra.mxu0 %v945
        %959 = vmatprep.subr.bf16.mxu0 0
        %960 = vmatpush1.bf16.msra.mxu0 %v944
        %961 = vmatprep.subr.bf16.mxu0 0
        %962 = vmatpush1.bf16.msra.mxu0 %v943
        %963 = vmatprep.subr.bf16.mxu0 0
        %964 = vmatpush1.bf16.msra.mxu0 %v942
        %965 = vmatprep.subr.bf16.mxu0 0
        %966 = vmatpush1.bf16.msra.mxu0 %v941
        %967 = vmatprep.subr.bf16.mxu0 0
        %968 = vmatpush1.bf16.msra.mxu0 %v940
        %969 = vmatprep.subr.bf16.mxu0 0
        %970 = vmatpush1.bf16.msra.mxu0 %v939
        %971 = vmatprep.subr.bf16.mxu0 0
        %972 = vmatpush2.bf16.msra.mxu0 0
        %973 = vmatprep.subr.bf16.mxu0 0
        %974 = vmatpush2.bf16.msra.mxu0 0
        %975 = vmatprep.subr.bf16.mxu0 0
        %976 = vmatpush2.bf16.msra.mxu0 0
        %977 = vmatprep.subr.bf16.mxu0 0
        %978 = vmatpush2.bf16.msra.mxu0 0
        %979 = vmatprep.subr.bf16.mxu0 0
        %980 = vmatpush2.bf16.msra.mxu0 0
        %981 = vmatprep.subr.bf16.mxu0 0
        %982 = vmatpush2.bf16.msra.mxu0 0
        %983 = vmatprep.subr.bf16.mxu0 0
        %984 = vmatpush2.bf16.msra.mxu0 0
        %985 = vmatprep.subr.bf16.mxu0 0
        %986 = vmatpush2.bf16.msra.mxu0 0
        %987 = vmatprep.mubr.bf16.mxu0 0
        %988 = vmatmul.mubr.bf16.gmra.mxu0 %v882
        %v989 = vpop.f32.mrf.mxu0
        %v990 = vadd.f32 %v905, %v989
        %v991 = vpop.f32.mrf.mxu0
        %v992 = vpop.f32.mrf.mxu0
        %v993 = vadd.f32 %v905, %v992
        %v994 = vpop.f32.mrf.mxu0
        %995 = vmatprep.mubr.bf16.mxu0 0
        %996 = vmatmul.mubr.bf16.gmra.mxu0 %v883
        %v997 = vpop.f32.mrf.mxu0
        %v998 = vadd.f32 %v905, %v997
        %v999 = vpop.f32.mrf.mxu0
        %v1000 = vpop.f32.mrf.mxu0
        %v1001 = vadd.f32 %v905, %v1000
        %v1002 = vpop.f32.mrf.mxu0
        %1003 = vdwg.mxu0
        %vm1004 = vcmask 130048
        %1005 = vst.msk [vmem:[%s362] sm:$0xff] %vm1004, %v990
        %1006 = vst.msk [vmem:[%s362 + $0x8] sm:$0xff] %vm1004, %v993
        %1007 = vst.msk [vmem:[%s362 + $0x10] sm:$0xff] %vm1004, %v998
        %1008 = vst.msk [vmem:[%s362 + $0x18] sm:$0xff] %vm1004, %v1001
        %s1009 = smul.u32 4, %s22
        %p1010 = scmp.lt.s32.totalorder %s1009, 7
        %s1011 = scalar_select %p1010, %s1009, 7
        %s1012 = smul.addr %s1011, 8
        %s1013 = scalar_lea.vmem %s9, %s1012
        // Predicated region
        $region65: #{tpu_custom_call.1} parent=55 // pred_check
          %p1014 = pneg %p234
        $region66: #{tpu_custom_call.1} parent=55 // pred_check_branch
          %1016 = sbr.rel (%p1014) target = $region68
        $region67: #{tpu_custom_call.1} parent=55 // pred_region
          %s1017 = smul.u32 4, %s22
        $region68: #{tpu_custom_call.1} parent=55 // pred_fallthru
          _
      $region56: #{tpu_custom_call.1} parent=5 // pred_fallthru
        _
      %p1018 = scmp.le.s32.totalorder 2, %s17
      // Predicated region
      $region69: #{tpu_custom_call.1} parent=5 // pred_check
        %p1019 = pneg %p1018
      $region70: #{tpu_custom_call.1} parent=5 // pred_check_branch
        %1021 = sbr.rel (%p1019) target = $region72
      $region71: #{tpu_custom_call.1} parent=5 // pred_region
        %s1022 = ssub.s32 %s17, 2
        // Predicated region
        $region73: #{tpu_custom_call.1} parent=71 // pred_check
          %p1023 = pneg %p240
        $region74: #{tpu_custom_call.1} parent=71 // pred_check_branch
          %1025 = sbr.rel (%p1023) target = $region76
        $region75: #{tpu_custom_call.1} parent=71 // pred_region
          %s1026 = smul.u32 4, %s23
          %p1027 = scmp.lt.s32.totalorder %s1026, 7
          %s1028 = scalar_select %p1027, %s1026, 7
          %s1029 = smul.addr %s1028, 8
          %s1030 = scalar_lea.vmem %s9, %s1029
        $region76: #{tpu_custom_call.1} parent=71 // pred_fallthru
          _
      $region72: #{tpu_custom_call.1} parent=5 // pred_fallthru
        _
    $region6: #{tpu_custom_call.1} parent=1 // loop_footer
      %s21 = sadd.s32 1, %s17
    $region7: #{tpu_custom_call.1} parent=1 // loop_footer_branch
      %16 = sbr.rel target = $region3
    $region8: #{tpu_custom_call.1} parent=1 // loop_exit
      _
    %1031 = vsyncpa [#allocation3], 1
    %s1032 = scalar_lea.sflag [#allocation3], 1
    %1033 = vsyncpa %s1032, 1
    %1034 = vsyncpa [#allocation5], 1

</llo_original>
